<compile_context>
chip_gen: v6e
topology: v6e:2x2x1
jax: 0.10.0
libtpu: 0.0.40
codegen_flags: <defaults>
</compile_context>

<pallas_src>
import jax
import jax.numpy as jnp
from jax.experimental import pallas as pl
from jax.experimental.pallas import tpu as pltpu

LANE = 128


def _round_up(x, m):
    return (x + m - 1) // m * m


def nnet_kernel(x_ref, w1_ref, b1_ref, w2_ref, b2_ref, w3_ref, b3_ref, o_ref):
    def sigmoid(z):
        # z is f32. exp + approx reciprocal both land on the EUP slot.
        return pl.reciprocal(1.0 + jnp.exp(-z), approx=True)

    # Layer 1: Linear + sigmoid (bf16 MXU inputs, f32 accumulate / elementwise)
    h1 = jnp.dot(x_ref[...], w1_ref[...], preferred_element_type=jnp.float32)
    h1 = sigmoid(h1 + b1_ref[...])
    # dropout (eval mode) -> identity

    # Layer 2: Linear + sigmoid
    h2 = jnp.dot(h1.astype(w2_ref.dtype), w2_ref[...],
                 preferred_element_type=jnp.float32)
    h2 = sigmoid(h2 + b2_ref[...])
    # dropout (eval mode) -> identity

    # Layer 3: Linear + sigmoid
    h3 = jnp.dot(h2.astype(w3_ref.dtype), w3_ref[...],
                 preferred_element_type=jnp.float32)
    h3 = sigmoid(h3 + b3_ref[...])

    o_ref[...] = h3.astype(o_ref.dtype)


def nnet_forward(x, w1, b1, w2, b2, w3, b3, *, block_b=256,
                 compute_dtype=jnp.bfloat16):
    """x: [B, d_in]; weights pre-transposed as [fan_in, fan_out]; biases 1-D."""
    B, d_in = x.shape
    d_h = w1.shape[1]
    d_out = w3.shape[1]
    f32 = jnp.float32

    # Lane-dense padded feature dims (multiples of 128).
    d_in_p = _round_up(d_in, LANE)
    d_h_p = _round_up(d_h, LANE)
    d_out_p = _round_up(d_out, LANE)

    # Batch tile: large by default, clamped for tiny batches, multiple of 16
    # (bf16 sublane packing). Ragged batches are zero-padded, not asserted.
    bb = min(block_b, _round_up(B, 16))
    B_p = _round_up(B, bb)
    grid = (pl.cdiv(B_p, bb),)

    # Wrapper-side layout plumbing: zero-pad everything. Padded hidden lanes
    # produce sigmoid(0)=0.5 but multiply zero weight rows downstream, so the
    # valid output columns are unaffected; padded rows/cols are sliced off.
    xp = jnp.zeros((B_p, d_in_p), compute_dtype).at[:B, :d_in].set(
        x.astype(compute_dtype))
    w1p = jnp.zeros((d_in_p, d_h_p), compute_dtype).at[:d_in, :d_h].set(
        w1.astype(compute_dtype))
    w2p = jnp.zeros((d_h_p, d_h_p), compute_dtype).at[:d_h, :d_h].set(
        w2.astype(compute_dtype))
    w3p = jnp.zeros((d_h_p, d_out_p), compute_dtype).at[:d_h, :d_out].set(
        w3.astype(compute_dtype))
    b1p = jnp.zeros((1, d_h_p), f32).at[:, :d_h].set(b1.astype(f32).reshape(1, d_h))
    b2p = jnp.zeros((1, d_h_p), f32).at[:, :d_h].set(b2.astype(f32).reshape(1, d_h))
    b3p = jnp.zeros((1, d_out_p), f32).at[:, :d_out].set(b3.astype(f32).reshape(1, d_out))

    out_p = pl.pallas_call(
        nnet_kernel,
        out_shape=jax.ShapeDtypeStruct((B_p, d_out_p), jnp.float32),
        grid_spec=pltpu.PrefetchScalarGridSpec(
            num_scalar_prefetch=0,
            grid=grid,
            in_specs=[
                pl.BlockSpec((bb, d_in_p), lambda i: (i, 0)),      # x tile (pipelined)
                pl.BlockSpec((d_in_p, d_h_p), lambda i: (0, 0)),   # W1 (resident)
                pl.BlockSpec((1, d_h_p), lambda i: (0, 0)),        # b1
                pl.BlockSpec((d_h_p, d_h_p), lambda i: (0, 0)),    # W2 (resident)
                pl.BlockSpec((1, d_h_p), lambda i: (0, 0)),        # b2
                pl.BlockSpec((d_h_p, d_out_p), lambda i: (0, 0)),  # W3 (resident)
                pl.BlockSpec((1, d_out_p), lambda i: (0, 0)),      # b3
            ],
            out_specs=pl.BlockSpec((bb, d_out_p), lambda i: (i, 0)),
        ),
        compiler_params=pltpu.CompilerParams(
            dimension_semantics=("parallel",),   # batch tiles shard across TCs (v7x)
            vmem_limit_bytes=64 * 1024 * 1024,
        ),
    )(xp, w1p, b1p, w2p, b2p, w3p, b3p)

    return out_p[:B, :d_out]


def init_linear_params(key, fan_in, fan_out, dtype=jnp.float32):
    """Deterministic Kaiming-uniform-ish init (matches nn.Linear's ranges)."""
    kw, kb = jax.random.split(key)
    bound = 1.0 / jnp.sqrt(fan_in)
    # stored pre-transposed: [fan_in, fan_out]
    w = jax.random.uniform(kw, (fan_in, fan_out), dtype, -bound, bound)
    b = jax.random.uniform(kb, (fan_out,), dtype, -bound, bound)
    return w, b


if __name__ == "__main__":
    # Small shapes implied by the module: input_dim=16, hidden_dim=32, output_dim=8.
    # Batch=10 (not a multiple of the tile) exercises the ragged-batch padding path.
    batch, input_dim, hidden_dim, output_dim = 10, 16, 32, 8
    dropout_rate = 0.5  # unused at inference

    key = jax.random.PRNGKey(0)
    kx, k1, k2, k3 = jax.random.split(key, 4)

    x = jax.random.normal(kx, (batch, input_dim), jnp.float32)
    w1, b1 = init_linear_params(k1, input_dim, hidden_dim)
    w2, b2 = init_linear_params(k2, hidden_dim, hidden_dim)
    w3, b3 = init_linear_params(k3, hidden_dim, output_dim)

    out = nnet_forward(x, w1, b1, w2, b2, w3, b3)
    out = jax.block_until_ready(out)

    # Reference in plain f32 JAX (same eval-mode semantics). The kernel uses
    # bf16 MXU inputs + approx reciprocal, so tolerance is loosened accordingly.
    h = jax.nn.sigmoid(x @ w1 + b1)
    h = jax.nn.sigmoid(h @ w2 + b2)
    ref = jax.nn.sigmoid(h @ w3 + b3)

    assert out.shape == (batch, output_dim)
    assert jnp.allclose(out, ref, atol=2e-2, rtol=2e-2), float(
        jnp.max(jnp.abs(out - ref)))

    print("KERNEL_OK")
</pallas_src>

<mosaic_0001>
module attributes {stable_mosaic.version = 11 : i64} {
  func.func @nnet_kernel(%arg0: i32, %arg1: memref<16x128xbf16, #tpu.memory_space<vmem>>, %arg2: memref<128x128xbf16, #tpu.memory_space<vmem>>, %arg3: memref<1x128xf32, #tpu.memory_space<vmem>>, %arg4: memref<128x128xbf16, #tpu.memory_space<vmem>>, %arg5: memref<1x128xf32, #tpu.memory_space<vmem>>, %arg6: memref<128x128xbf16, #tpu.memory_space<vmem>>, %arg7: memref<1x128xf32, #tpu.memory_space<vmem>>, %arg8: memref<16x128xf32, #tpu.memory_space<vmem>>) attributes {dimension_semantics = [#tpu.dimension_semantics<parallel>], iteration_bounds = array<i64: 1>, scalar_prefetch = 0 : i64, scratch_operands = 0 : i64, tpu.core_type = #tpu.core_type<tc>, window_params = [{transform_indices = @transform_0, window_bounds = array<i64: 16, 128>}, {pipeline_mode = #tpu.pipeline_mode<synchronous>, transform_indices = @transform_1, window_bounds = array<i64: 128, 128>}, {pipeline_mode = #tpu.pipeline_mode<synchronous>, transform_indices = @transform_2, window_bounds = array<i64: 1, 128>}, {pipeline_mode = #tpu.pipeline_mode<synchronous>, transform_indices = @transform_3, window_bounds = array<i64: 128, 128>}, {pipeline_mode = #tpu.pipeline_mode<synchronous>, transform_indices = @transform_4, window_bounds = array<i64: 1, 128>}, {pipeline_mode = #tpu.pipeline_mode<synchronous>, transform_indices = @transform_5, window_bounds = array<i64: 128, 128>}, {pipeline_mode = #tpu.pipeline_mode<synchronous>, transform_indices = @transform_6, window_bounds = array<i64: 1, 128>}, {transform_indices = @transform_7, window_bounds = array<i64: 16, 128>}]} {
    %c0 = arith.constant 0 : index
    %c0_0 = arith.constant 0 : index
    %0 = vector.load %arg1[%c0, %c0_0] : memref<16x128xbf16, #tpu.memory_space<vmem>>, vector<16x128xbf16>
    %c0_1 = arith.constant 0 : index
    %c0_2 = arith.constant 0 : index
    %1 = vector.load %arg2[%c0_1, %c0_2] : memref<128x128xbf16, #tpu.memory_space<vmem>>, vector<128x128xbf16>
    %cst = arith.constant dense<0.000000e+00> : vector<16x128xf32>
    %2 = tpu.matmul %0, %1, %cst {dimension_numbers = #tpu.dot_dimension_numbers<[1], [0], [0], [1], [0, 0, 1, 1], [], []>} : vector<16x128xbf16>, vector<128x128xbf16>, vector<16x128xf32> -> vector<16x128xf32>
    %c0_3 = arith.constant 0 : index
    %c0_4 = arith.constant 0 : index
    %3 = vector.load %arg3[%c0_3, %c0_4] : memref<1x128xf32, #tpu.memory_space<vmem>>, vector<1x128xf32>
    %4 = vector.broadcast %3 : vector<1x128xf32> to vector<16x128xf32>
    %5 = arith.addf %2, %4 : vector<16x128xf32>
    %cst_5 = arith.constant 0.000000e+00 : f32
    %6 = vector.broadcast %cst_5 : f32 to vector<16x128xf32>
    %7 = arith.subf %6, %5 : vector<16x128xf32>
    %8 = math.exp %7 : vector<16x128xf32>
    %cst_6 = arith.constant 1.000000e+00 : f32
    %9 = vector.broadcast %cst_6 : f32 to vector<16x128xf32>
    %10 = arith.addf %9, %8 : vector<16x128xf32>
    %11 = tpu.reciprocal %10 {approx = true} : vector<16x128xf32> -> vector<16x128xf32>
    %12 = arith.truncf %11 : vector<16x128xf32> to vector<16x128xbf16>
    %c0_7 = arith.constant 0 : index
    %c0_8 = arith.constant 0 : index
    %13 = vector.load %arg4[%c0_7, %c0_8] : memref<128x128xbf16, #tpu.memory_space<vmem>>, vector<128x128xbf16>
    %cst_9 = arith.constant dense<0.000000e+00> : vector<16x128xf32>
    %14 = tpu.matmul %12, %13, %cst_9 {dimension_numbers = #tpu.dot_dimension_numbers<[1], [0], [0], [1], [0, 0, 1, 1], [], []>} : vector<16x128xbf16>, vector<128x128xbf16>, vector<16x128xf32> -> vector<16x128xf32>
    %c0_10 = arith.constant 0 : index
    %c0_11 = arith.constant 0 : index
    %15 = vector.load %arg5[%c0_10, %c0_11] : memref<1x128xf32, #tpu.memory_space<vmem>>, vector<1x128xf32>
    %16 = vector.broadcast %15 : vector<1x128xf32> to vector<16x128xf32>
    %17 = arith.addf %14, %16 : vector<16x128xf32>
    %cst_12 = arith.constant 0.000000e+00 : f32
    %18 = vector.broadcast %cst_12 : f32 to vector<16x128xf32>
    %19 = arith.subf %18, %17 : vector<16x128xf32>
    %20 = math.exp %19 : vector<16x128xf32>
    %cst_13 = arith.constant 1.000000e+00 : f32
    %21 = vector.broadcast %cst_13 : f32 to vector<16x128xf32>
    %22 = arith.addf %21, %20 : vector<16x128xf32>
    %23 = tpu.reciprocal %22 {approx = true} : vector<16x128xf32> -> vector<16x128xf32>
    %24 = arith.truncf %23 : vector<16x128xf32> to vector<16x128xbf16>
    %c0_14 = arith.constant 0 : index
    %c0_15 = arith.constant 0 : index
    %25 = vector.load %arg6[%c0_14, %c0_15] : memref<128x128xbf16, #tpu.memory_space<vmem>>, vector<128x128xbf16>
    %cst_16 = arith.constant dense<0.000000e+00> : vector<16x128xf32>
    %26 = tpu.matmul %24, %25, %cst_16 {dimension_numbers = #tpu.dot_dimension_numbers<[1], [0], [0], [1], [0, 0, 1, 1], [], []>} : vector<16x128xbf16>, vector<128x128xbf16>, vector<16x128xf32> -> vector<16x128xf32>
    %c0_17 = arith.constant 0 : index
    %c0_18 = arith.constant 0 : index
    %27 = vector.load %arg7[%c0_17, %c0_18] : memref<1x128xf32, #tpu.memory_space<vmem>>, vector<1x128xf32>
    %28 = vector.broadcast %27 : vector<1x128xf32> to vector<16x128xf32>
    %29 = arith.addf %26, %28 : vector<16x128xf32>
    %cst_19 = arith.constant 0.000000e+00 : f32
    %30 = vector.broadcast %cst_19 : f32 to vector<16x128xf32>
    %31 = arith.subf %30, %29 : vector<16x128xf32>
    %32 = math.exp %31 : vector<16x128xf32>
    %cst_20 = arith.constant 1.000000e+00 : f32
    %33 = vector.broadcast %cst_20 : f32 to vector<16x128xf32>
    %34 = arith.addf %33, %32 : vector<16x128xf32>
    %35 = tpu.reciprocal %34 {approx = true} : vector<16x128xf32> -> vector<16x128xf32>
    %c0_21 = arith.constant 0 : index
    %c0_22 = arith.constant 0 : index
    %36 = vector.load %arg8[%c0_21, %c0_22] : memref<16x128xf32, #tpu.memory_space<vmem>>, vector<16x128xf32>
    tpu.vector_store %arg8[%c0_21, %c0_22], %35 {strides = array<i32>} : memref<16x128xf32, #tpu.memory_space<vmem>>, vector<16x128xf32>,
    return
  }
  func.func @transform_0(%arg0: i32) -> (i32, i32) {
    %c0_i32 = arith.constant 0 : i32
    %c0_i32_0 = arith.constant 0 : i32
    return %arg0, %c0_i32 : i32, i32
  }
  func.func @transform_1(%arg0: i32) -> (i32, i32) {
    %c0_i32 = arith.constant 0 : i32
    %c0_i32_0 = arith.constant 0 : i32
    %c0_i32_1 = arith.constant 0 : i32
    return %c0_i32, %c0_i32_0 : i32, i32
  }
  func.func @transform_2(%arg0: i32) -> (i32, i32) {
    %c0_i32 = arith.constant 0 : i32
    %c0_i32_0 = arith.constant 0 : i32
    %c0_i32_1 = arith.constant 0 : i32
    return %c0_i32, %c0_i32_0 : i32, i32
  }
  func.func @transform_3(%arg0: i32) -> (i32, i32) {
    %c0_i32 = arith.constant 0 : i32
    %c0_i32_0 = arith.constant 0 : i32
    %c0_i32_1 = arith.constant 0 : i32
    return %c0_i32, %c0_i32_0 : i32, i32
  }
  func.func @transform_4(%arg0: i32) -> (i32, i32) {
    %c0_i32 = arith.constant 0 : i32
    %c0_i32_0 = arith.constant 0 : i32
    %c0_i32_1 = arith.constant 0 : i32
    return %c0_i32, %c0_i32_0 : i32, i32
  }
  func.func @transform_5(%arg0: i32) -> (i32, i32) {
    %c0_i32 = arith.constant 0 : i32
    %c0_i32_0 = arith.constant 0 : i32
    %c0_i32_1 = arith.constant 0 : i32
    return %c0_i32, %c0_i32_0 : i32, i32
  }
  func.func @transform_6(%arg0: i32) -> (i32, i32) {
    %c0_i32 = arith.constant 0 : i32
    %c0_i32_0 = arith.constant 0 : i32
    %c0_i32_1 = arith.constant 0 : i32
    return %c0_i32, %c0_i32_0 : i32, i32
  }
  func.func @transform_7(%arg0: i32) -> (i32, i32) {
    %c0_i32 = arith.constant 0 : i32
    %c0_i32_0 = arith.constant 0 : i32
    return %arg0, %c0_i32 : i32, i32
  }
}

</mosaic_0001>

<llo_original>
// kernel: tpu_custom_call.1
$region0: #{tpu_custom_call.1}
  #allocation0 [shape = 'u32[]', space=smem, size = 0x4, offset = 0x4, fixed_abs, tag = 'smem constant byte address 0x4 - core index']
  #allocation1 [shape = 'u32[144,128]{1,0:T(1,128)}', space=vmem, size = 0x12000, scoped, tag = 'internal scratch']
  %s0 = inlined_call_operand.hbm [shape: bf16[16,128], index: 0, kind: input, shape index: {}]
  %s1 = inlined_call_operand.hbm [shape: bf16[128,128], index: 1, kind: input, shape index: {}]
  %s2 = inlined_call_operand.vmem [shape: f32[1,128], index: 2, kind: input, shape index: {}]
  %s3 = inlined_call_operand.hbm [shape: bf16[128,128], index: 3, kind: input, shape index: {}]
  %s4 = inlined_call_operand.vmem [shape: f32[1,128], index: 4, kind: input, shape index: {}]
  %s5 = inlined_call_operand.hbm [shape: bf16[128,128], index: 5, kind: input, shape index: {}]
  %s6 = inlined_call_operand.vmem [shape: f32[1,128], index: 6, kind: input, shape index: {}]
  %s7 = inlined_call_operand.hbm [shape: f32[16,128], index: 7, kind: output, shape index: {}]
  %s8 = sld [smem:[#allocation0]]
  $region54: #{tpu_custom_call.1} parent=0
    _
  %s10 = ssub.s32 1, %s8
  %s11 = scalar_select 0, %s10, %s8
  $region1: #{tpu_custom_call.1} parent=0
    #allocation2 [shape = 'u8[4096]{0}', space=vmem, size = 0x1000, scoped, tag = 'input window, operand 0, single buffered']
    #allocation3 [shape = 's32[1]{0}', space=sflag, size = 0x4, scoped, tag = 'scoped memory for tpu_custom_call.1']
    #allocation4 [shape = 's32[1]{0}', space=sflag, size = 0x4, scoped, tag = 'scoped memory for tpu_custom_call.1']
    #allocation5 [shape = 'u8[32768]{0}', space=vmem, size = 0x8000, scoped, tag = 'input window, operand 1, single buffered']
    #allocation6 [shape = 's32[1]{0}', space=sflag, size = 0x4, scoped, tag = 'scoped memory for tpu_custom_call.1']
    #allocation7 [shape = 'u8[32768]{0}', space=vmem, size = 0x8000, scoped, tag = 'input window, operand 3, single buffered']
    #allocation8 [shape = 'u8[32768]{0}', space=vmem, size = 0x8000, scoped, tag = 'input window, operand 5, single buffered']
    #allocation9 [shape = 's32[1]{0}', space=sflag, size = 0x4, scoped, tag = 'scoped memory for tpu_custom_call.1']
    #allocation10 [shape = 'u8[8192]{0}', space=vmem, size = 0x2000, scoped, tag = 'output window, operand 0, single buffered']
    %12 = vsyncpa [#allocation3], 0
    %13 = vsyncpa [#allocation6], 0
    %14 = vsyncpa [#allocation9], 0
    %15 = vsyncpa [#allocation4], 0
    // Predicated region
    $region2: #{tpu_custom_call.1} parent=1 // pred_check
      _
    $region3: #{tpu_custom_call.1} parent=1 // pred_check_branch
      %17 = sbr.rel (0) target = $region5
    $region4: #{tpu_custom_call.1} parent=1 // pred_region
      %s19 = ssub.s32 128, 128
      %20 = vsyncadd [#allocation3], %s19
      %s21 = sshll.u32 [#allocation2], 4
      %s22 = int_to_ptr.vmem [resolvable:$true] %s21
      %27 = dma.hbm_to_vmem [thread:$0]  %s0, 128, %s22, [#allocation3], 64, 64, 4
    $region5: #{tpu_custom_call.1} parent=1 // pred_fallthru
      _
    // Predicated region
    $region6: #{tpu_custom_call.1} parent=1 // pred_check
      _
    $region7: #{tpu_custom_call.1} parent=1 // pred_check_branch
      %29 = sbr.rel (0) target = $region9
    $region8: #{tpu_custom_call.1} parent=1 // pred_region
      %s31 = ssub.s32 1024, 1024
      %32 = vsyncadd [#allocation6], %s31
      %s33 = sshll.u32 [#allocation5], 4
      %s34 = int_to_ptr.vmem [resolvable:$true] %s33
      %39 = dma.hbm_to_vmem [thread:$0]  %s1, 1024, %s34, [#allocation6], 64, 64, 4
    $region9: #{tpu_custom_call.1} parent=1 // pred_fallthru
      _
    // Predicated region
    $region10: #{tpu_custom_call.1} parent=1 // pred_check
      _
    $region11: #{tpu_custom_call.1} parent=1 // pred_check_branch
      %41 = sbr.rel (0) target = $region13
    $region12: #{tpu_custom_call.1} parent=1 // pred_region
      _
    $region13: #{tpu_custom_call.1} parent=1 // pred_fallthru
      _
    // Predicated region
    $region14: #{tpu_custom_call.1} parent=1 // pred_check
      _
    $region15: #{tpu_custom_call.1} parent=1 // pred_check_branch
      %43 = sbr.rel (0) target = $region17
    $region16: #{tpu_custom_call.1} parent=1 // pred_region
      %s45 = ssub.s32 1024, 1024
      %46 = vsyncadd [#allocation6], %s45
      %s47 = sshll.u32 [#allocation7], 4
      %s48 = int_to_ptr.vmem [resolvable:$true] %s47
      %53 = dma.hbm_to_vmem [thread:$0]  %s3, 1024, %s48, [#allocation6], 64, 64, 4
    $region17: #{tpu_custom_call.1} parent=1 // pred_fallthru
      _
    // Predicated region
    $region18: #{tpu_custom_call.1} parent=1 // pred_check
      _
    $region19: #{tpu_custom_call.1} parent=1 // pred_check_branch
      %55 = sbr.rel (0) target = $region21
    $region20: #{tpu_custom_call.1} parent=1 // pred_region
      _
    $region21: #{tpu_custom_call.1} parent=1 // pred_fallthru
      _
    // Predicated region
    $region22: #{tpu_custom_call.1} parent=1 // pred_check
      _
    $region23: #{tpu_custom_call.1} parent=1 // pred_check_branch
      %57 = sbr.rel (0) target = $region25
    $region24: #{tpu_custom_call.1} parent=1 // pred_region
      %s59 = ssub.s32 1024, 1024
      %60 = vsyncadd [#allocation9], %s59
      %s61 = sshll.u32 [#allocation8], 4
      %s62 = int_to_ptr.vmem [resolvable:$true] %s61
      %67 = dma.hbm_to_vmem [thread:$0]  %s5, 1024, %s62, [#allocation9], 64, 64, 4
    $region25: #{tpu_custom_call.1} parent=1 // pred_fallthru
      _
    // Predicated region
    $region26: #{tpu_custom_call.1} parent=1 // pred_check
      _
    $region27: #{tpu_custom_call.1} parent=1 // pred_check_branch
      %69 = sbr.rel (0) target = $region29
    $region28: #{tpu_custom_call.1} parent=1 // pred_region
      _
    $region29: #{tpu_custom_call.1} parent=1 // pred_fallthru
      _
    // Predicated region
    $region30: #{tpu_custom_call.1} parent=1 // pred_check
      _
    $region31: #{tpu_custom_call.1} parent=1 // pred_check_branch
      %71 = sbr.rel (0) target = $region33
    $region32: #{tpu_custom_call.1} parent=1 // pred_region
      %72 = dma.done [#allocation3], 128
    $region33: #{tpu_custom_call.1} parent=1 // pred_fallthru
      _
    // Predicated region
    $region34: #{tpu_custom_call.1} parent=1 // pred_check
      _
    $region35: #{tpu_custom_call.1} parent=1 // pred_check_branch
      %74 = sbr.rel (0) target = $region37
    $region36: #{tpu_custom_call.1} parent=1 // pred_region
      %75 = dma.done [#allocation6], 1024
    $region37: #{tpu_custom_call.1} parent=1 // pred_fallthru
      _
    // Predicated region
    $region38: #{tpu_custom_call.1} parent=1 // pred_check
      _
    $region39: #{tpu_custom_call.1} parent=1 // pred_check_branch
      %77 = sbr.rel (0) target = $region41
    $region40: #{tpu_custom_call.1} parent=1 // pred_region
      %78 = dma.done [#allocation6], 1024
    $region41: #{tpu_custom_call.1} parent=1 // pred_fallthru
      _
    // Predicated region
    $region42: #{tpu_custom_call.1} parent=1 // pred_check
      _
    $region43: #{tpu_custom_call.1} parent=1 // pred_check_branch
      %80 = sbr.rel (0) target = $region45
    $region44: #{tpu_custom_call.1} parent=1 // pred_region
      %81 = dma.done [#allocation9], 1024
    $region45: #{tpu_custom_call.1} parent=1 // pred_fallthru
      _
    %v83 = vld [vmem:[#allocation2] sm:$0xf]
    %v84 = vld [vmem:[#allocation2 + $0x4] sm:$0xf]
    %v85 = vld [vmem:[#allocation5] sm:$0xf]
    %v86 = vld [vmem:[#allocation5 + $0x4] sm:$0xf]
    %v87 = vld [vmem:[#allocation5 + $0x8] sm:$0xf]
    %v88 = vld [vmem:[#allocation5 + $0xc] sm:$0xf]
    %v89 = vld [vmem:[#allocation5 + $0x10] sm:$0xf]
    %v90 = vld [vmem:[#allocation5 + $0x14] sm:$0xf]
    %v91 = vld [vmem:[#allocation5 + $0x18] sm:$0xf]
    %v92 = vld [vmem:[#allocation5 + $0x1c] sm:$0xf]
    %v93 = vld [vmem:[#allocation5 + $0x20] sm:$0xf]
    %v94 = vld [vmem:[#allocation5 + $0x24] sm:$0xf]
    %v95 = vld [vmem:[#allocation5 + $0x28] sm:$0xf]
    %v96 = vld [vmem:[#allocation5 + $0x2c] sm:$0xf]
    %v97 = vld [vmem:[#allocation5 + $0x30] sm:$0xf]
    %v98 = vld [vmem:[#allocation5 + $0x34] sm:$0xf]
    %v99 = vld [vmem:[#allocation5 + $0x38] sm:$0xf]
    %v100 = vld [vmem:[#allocation5 + $0x3c] sm:$0xf]
    %v101 = vld [vmem:[%s2] sm:$0x1]
    %v103 = vlaneseq
    %v104 = vshrl.u32 %v103, 7
    %v105 = vsub.s32 0, %v104
    %v106 = vrot.slane %v101, %v105
    %v110 = vunpack.c.l.b16 %v83
    %v111 = vunpack.c.l.b16 %v84
    %v112 = vpack.c.b16 %v111, %v110
    %v130 = vunpack.c.l.b16 %v85
    %v131 = vunpack.c.l.b16 %v86
    %v132 = vunpack.c.l.b16 %v87
    %v133 = vunpack.c.l.b16 %v88
    %v134 = vunpack.c.l.b16 %v89
    %v135 = vunpack.c.l.b16 %v90
    %v136 = vunpack.c.l.b16 %v91
    %v137 = vunpack.c.l.b16 %v92
    %v138 = vunpack.c.l.b16 %v93
    %v139 = vunpack.c.l.b16 %v94
    %v140 = vunpack.c.l.b16 %v95
    %v141 = vunpack.c.l.b16 %v96
    %v142 = vunpack.c.l.b16 %v97
    %v143 = vunpack.c.l.b16 %v98
    %v144 = vunpack.c.l.b16 %v99
    %v145 = vunpack.c.l.b16 %v100
    %v146 = vpack.c.b16 %v131, %v130
    %v147 = vpack.c.b16 %v133, %v132
    %v148 = vpack.c.b16 %v135, %v134
    %v149 = vpack.c.b16 %v137, %v136
    %v150 = vpack.c.b16 %v139, %v138
    %v151 = vpack.c.b16 %v141, %v140
    %v152 = vpack.c.b16 %v143, %v142
    %v153 = vpack.c.b16 %v145, %v144
    %162 = vmatprep.subr.bf16.mxu0 0
    %163 = vmatpush1.bf16.msra.mxu0 %v153
    %164 = vmatprep.subr.bf16.mxu0 0
    %165 = vmatpush1.bf16.msra.mxu0 %v152
    %166 = vmatprep.subr.bf16.mxu0 0
    %167 = vmatpush1.bf16.msra.mxu0 %v151
    %168 = vmatprep.subr.bf16.mxu0 0
    %169 = vmatpush1.bf16.msra.mxu0 %v150
    %170 = vmatprep.subr.bf16.mxu0 0
    %171 = vmatpush1.bf16.msra.mxu0 %v149
    %172 = vmatprep.subr.bf16.mxu0 0
    %173 = vmatpush1.bf16.msra.mxu0 %v148
    %174 = vmatprep.subr.bf16.mxu0 0
    %175 = vmatpush1.bf16.msra.mxu0 %v147
    %176 = vmatprep.subr.bf16.mxu0 0
    %177 = vmatpush1.bf16.msra.mxu0 %v146
    %178 = vmatprep.subr.bf16.mxu0 0
    %179 = vmatpush2.bf16.msra.mxu0 0
    %180 = vmatprep.subr.bf16.mxu0 0
    %181 = vmatpush2.bf16.msra.mxu0 0
    %182 = vmatprep.subr.bf16.mxu0 0
    %183 = vmatpush2.bf16.msra.mxu0 0
    %184 = vmatprep.subr.bf16.mxu0 0
    %185 = vmatpush2.bf16.msra.mxu0 0
    %186 = vmatprep.subr.bf16.mxu0 0
    %187 = vmatpush2.bf16.msra.mxu0 0
    %188 = vmatprep.subr.bf16.mxu0 0
    %189 = vmatpush2.bf16.msra.mxu0 0
    %190 = vmatprep.subr.bf16.mxu0 0
    %191 = vmatpush2.bf16.msra.mxu0 0
    %192 = vmatprep.subr.bf16.mxu0 0
    %193 = vmatpush2.bf16.msra.mxu0 0
    %194 = vmatprep.mubr.bf16.mxu0 0
    %195 = vmatmul.mubr.bf16.gmra.mxu0 %v112
    %v196 = vpop.f32.mrf.mxu0
    %v197 = vadd.f32 %v106, %v196
    %v198 = vpop.f32.mrf.mxu0
    %v199 = vpop.f32.mrf.mxu0
    %v200 = vadd.f32 %v106, %v199
    %v201 = vpop.f32.mrf.mxu0
    %202 = vdwg.mxu0
    %v203 = vsub.f32 0.0, %v197
    %v204 = vsub.f32 0.0, %v200
    %v205 = vmul.f32 %v203, 1.442695
    %v206 = vpow.pop %v205
    %v207 = vmul.f32 %v204, 1.442695
    %v208 = vpow.pop %v207
    %v209 = vadd.f32 %v206, 1.0
    %v210 = vadd.f32 %v208, 1.0
    %v211 = vrcp.pop %v209
    %v212 = vrcp.pop %v210
    %v213 = vpack.c.bf16 %v212, %v211
    %v214 = vld [vmem:[#allocation7] sm:$0xf]
    %v215 = vld [vmem:[#allocation7 + $0x4] sm:$0xf]
    %v216 = vld [vmem:[#allocation7 + $0x8] sm:$0xf]
    %v217 = vld [vmem:[#allocation7 + $0xc] sm:$0xf]
    %v218 = vld [vmem:[#allocation7 + $0x10] sm:$0xf]
    %v219 = vld [vmem:[#allocation7 + $0x14] sm:$0xf]
    %v220 = vld [vmem:[#allocation7 + $0x18] sm:$0xf]
    %v221 = vld [vmem:[#allocation7 + $0x1c] sm:$0xf]
    %v222 = vld [vmem:[#allocation7 + $0x20] sm:$0xf]
    %v223 = vld [vmem:[#allocation7 + $0x24] sm:$0xf]
    %v224 = vld [vmem:[#allocation7 + $0x28] sm:$0xf]
    %v225 = vld [vmem:[#allocation7 + $0x2c] sm:$0xf]
    %v226 = vld [vmem:[#allocation7 + $0x30] sm:$0xf]
    %v227 = vld [vmem:[#allocation7 + $0x34] sm:$0xf]
    %v228 = vld [vmem:[#allocation7 + $0x38] sm:$0xf]
    %v229 = vld [vmem:[#allocation7 + $0x3c] sm:$0xf]
    %v230 = vld [vmem:[%s4] sm:$0x1]
    %v232 = vlaneseq
    %v233 = vshrl.u32 %v232, 7
    %v234 = vsub.s32 0, %v233
    %v235 = vrot.slane %v230, %v234
    %v253 = vunpack.c.l.b16 %v214
    %v254 = vunpack.c.l.b16 %v215
    %v255 = vunpack.c.l.b16 %v216
    %v256 = vunpack.c.l.b16 %v217
    %v257 = vunpack.c.l.b16 %v218
    %v258 = vunpack.c.l.b16 %v219
    %v259 = vunpack.c.l.b16 %v220
    %v260 = vunpack.c.l.b16 %v221
    %v261 = vunpack.c.l.b16 %v222
    %v262 = vunpack.c.l.b16 %v223
    %v263 = vunpack.c.l.b16 %v224
    %v264 = vunpack.c.l.b16 %v225
    %v265 = vunpack.c.l.b16 %v226
    %v266 = vunpack.c.l.b16 %v227
    %v267 = vunpack.c.l.b16 %v228
    %v268 = vunpack.c.l.b16 %v229
    %v269 = vpack.c.b16 %v254, %v253
    %v270 = vpack.c.b16 %v256, %v255
    %v271 = vpack.c.b16 %v258, %v257
    %v272 = vpack.c.b16 %v260, %v259
    %v273 = vpack.c.b16 %v262, %v261
    %v274 = vpack.c.b16 %v264, %v263
    %v275 = vpack.c.b16 %v266, %v265
    %v276 = vpack.c.b16 %v268, %v267
    %285 = vmatprep.subr.bf16.mxu0 0
    %286 = vmatpush1.bf16.msra.mxu0 %v276
    %287 = vmatprep.subr.bf16.mxu0 0
    %288 = vmatpush1.bf16.msra.mxu0 %v275
    %289 = vmatprep.subr.bf16.mxu0 0
    %290 = vmatpush1.bf16.msra.mxu0 %v274
    %291 = vmatprep.subr.bf16.mxu0 0
    %292 = vmatpush1.bf16.msra.mxu0 %v273
    %293 = vmatprep.subr.bf16.mxu0 0
    %294 = vmatpush1.bf16.msra.mxu0 %v272
    %295 = vmatprep.subr.bf16.mxu0 0
    %296 = vmatpush1.bf16.msra.mxu0 %v271
    %297 = vmatprep.subr.bf16.mxu0 0
    %298 = vmatpush1.bf16.msra.mxu0 %v270
    %299 = vmatprep.subr.bf16.mxu0 0
    %300 = vmatpush1.bf16.msra.mxu0 %v269
    %301 = vmatprep.subr.bf16.mxu0 0
    %302 = vmatpush2.bf16.msra.mxu0 0
    %303 = vmatprep.subr.bf16.mxu0 0
    %304 = vmatpush2.bf16.msra.mxu0 0
    %305 = vmatprep.subr.bf16.mxu0 0
    %306 = vmatpush2.bf16.msra.mxu0 0
    %307 = vmatprep.subr.bf16.mxu0 0
    %308 = vmatpush2.bf16.msra.mxu0 0
    %309 = vmatprep.subr.bf16.mxu0 0
    %310 = vmatpush2.bf16.msra.mxu0 0
    %311 = vmatprep.subr.bf16.mxu0 0
    %312 = vmatpush2.bf16.msra.mxu0 0
    %313 = vmatprep.subr.bf16.mxu0 0
    %314 = vmatpush2.bf16.msra.mxu0 0
    %315 = vmatprep.subr.bf16.mxu0 0
    %316 = vmatpush2.bf16.msra.mxu0 0
    %317 = vmatprep.mubr.bf16.mxu0 0
    %318 = vmatmul.mubr.bf16.gmra.mxu0 %v213
    %v319 = vpop.f32.mrf.mxu0
    %v320 = vadd.f32 %v235, %v319
    %v321 = vpop.f32.mrf.mxu0
    %v322 = vpop.f32.mrf.mxu0
    %v323 = vadd.f32 %v235, %v322
    %v324 = vpop.f32.mrf.mxu0
    %325 = vdwg.mxu0
    %v326 = vsub.f32 0.0, %v320
    %v327 = vsub.f32 0.0, %v323
    %v328 = vmul.f32 %v326, 1.442695
    %v329 = vpow.pop %v328
    %v330 = vmul.f32 %v327, 1.442695
    %v331 = vpow.pop %v330
    %v332 = vadd.f32 %v329, 1.0
    %v333 = vadd.f32 %v331, 1.0
    %v334 = vrcp.pop %v332
    %v335 = vrcp.pop %v333
    %v336 = vpack.c.bf16 %v335, %v334
    %v337 = vld [vmem:[#allocation8] sm:$0xf]
    %v338 = vld [vmem:[#allocation8 + $0x4] sm:$0xf]
    %v339 = vld [vmem:[#allocation8 + $0x8] sm:$0xf]
    %v340 = vld [vmem:[#allocation8 + $0xc] sm:$0xf]
    %v341 = vld [vmem:[#allocation8 + $0x10] sm:$0xf]
    %v342 = vld [vmem:[#allocation8 + $0x14] sm:$0xf]
    %v343 = vld [vmem:[#allocation8 + $0x18] sm:$0xf]
    %v344 = vld [vmem:[#allocation8 + $0x1c] sm:$0xf]
    %v345 = vld [vmem:[#allocation8 + $0x20] sm:$0xf]
    %v346 = vld [vmem:[#allocation8 + $0x24] sm:$0xf]
    %v347 = vld [vmem:[#allocation8 + $0x28] sm:$0xf]
    %v348 = vld [vmem:[#allocation8 + $0x2c] sm:$0xf]
    %v349 = vld [vmem:[#allocation8 + $0x30] sm:$0xf]
    %v350 = vld [vmem:[#allocation8 + $0x34] sm:$0xf]
    %v351 = vld [vmem:[#allocation8 + $0x38] sm:$0xf]
    %v352 = vld [vmem:[#allocation8 + $0x3c] sm:$0xf]
    %v353 = vld [vmem:[%s6] sm:$0x1]
    %v355 = vlaneseq
    %v356 = vshrl.u32 %v355, 7
    %v357 = vsub.s32 0, %v356
    %v358 = vrot.slane %v353, %v357
    %v376 = vunpack.c.l.b16 %v337
    %v377 = vunpack.c.l.b16 %v338
    %v378 = vunpack.c.l.b16 %v339
    %v379 = vunpack.c.l.b16 %v340
    %v380 = vunpack.c.l.b16 %v341
    %v381 = vunpack.c.l.b16 %v342
    %v382 = vunpack.c.l.b16 %v343
    %v383 = vunpack.c.l.b16 %v344
    %v384 = vunpack.c.l.b16 %v345
    %v385 = vunpack.c.l.b16 %v346
    %v386 = vunpack.c.l.b16 %v347
    %v387 = vunpack.c.l.b16 %v348
    %v388 = vunpack.c.l.b16 %v349
    %v389 = vunpack.c.l.b16 %v350
    %v390 = vunpack.c.l.b16 %v351
    %v391 = vunpack.c.l.b16 %v352
    %v392 = vpack.c.b16 %v377, %v376
    %v393 = vpack.c.b16 %v379, %v378
    %v394 = vpack.c.b16 %v381, %v380
    %v395 = vpack.c.b16 %v383, %v382
    %v396 = vpack.c.b16 %v385, %v384
    %v397 = vpack.c.b16 %v387, %v386
    %v398 = vpack.c.b16 %v389, %v388
    %v399 = vpack.c.b16 %v391, %v390
    %408 = vmatprep.subr.bf16.mxu0 0
    %409 = vmatpush1.bf16.msra.mxu0 %v399
    %410 = vmatprep.subr.bf16.mxu0 0
    %411 = vmatpush1.bf16.msra.mxu0 %v398
    %412 = vmatprep.subr.bf16.mxu0 0
    %413 = vmatpush1.bf16.msra.mxu0 %v397
    %414 = vmatprep.subr.bf16.mxu0 0
    %415 = vmatpush1.bf16.msra.mxu0 %v396
    %416 = vmatprep.subr.bf16.mxu0 0
    %417 = vmatpush1.bf16.msra.mxu0 %v395
    %418 = vmatprep.subr.bf16.mxu0 0
    %419 = vmatpush1.bf16.msra.mxu0 %v394
    %420 = vmatprep.subr.bf16.mxu0 0
    %421 = vmatpush1.bf16.msra.mxu0 %v393
    %422 = vmatprep.subr.bf16.mxu0 0
    %423 = vmatpush1.bf16.msra.mxu0 %v392
    %424 = vmatprep.subr.bf16.mxu0 0
    %425 = vmatpush2.bf16.msra.mxu0 0
    %426 = vmatprep.subr.bf16.mxu0 0
    %427 = vmatpush2.bf16.msra.mxu0 0
    %428 = vmatprep.subr.bf16.mxu0 0
    %429 = vmatpush2.bf16.msra.mxu0 0
    %430 = vmatprep.subr.bf16.mxu0 0
    %431 = vmatpush2.bf16.msra.mxu0 0
    %432 = vmatprep.subr.bf16.mxu0 0
    %433 = vmatpush2.bf16.msra.mxu0 0
    %434 = vmatprep.subr.bf16.mxu0 0
    %435 = vmatpush2.bf16.msra.mxu0 0
    %436 = vmatprep.subr.bf16.mxu0 0
    %437 = vmatpush2.bf16.msra.mxu0 0
    %438 = vmatprep.subr.bf16.mxu0 0
    %439 = vmatpush2.bf16.msra.mxu0 0
    %440 = vmatprep.mubr.bf16.mxu0 0
    %441 = vmatmul.mubr.bf16.gmra.mxu0 %v336
    %v442 = vpop.f32.mrf.mxu0
    %v443 = vadd.f32 %v358, %v442
    %v444 = vpop.f32.mrf.mxu0
    %v445 = vpop.f32.mrf.mxu0
    %v446 = vadd.f32 %v358, %v445
    %v447 = vpop.f32.mrf.mxu0
    %448 = vdwg.mxu0
    %v449 = vsub.f32 0.0, %v443
    %v450 = vsub.f32 0.0, %v446
    %v451 = vmul.f32 %v449, 1.442695
    %v452 = vpow.pop %v451
    %v453 = vmul.f32 %v450, 1.442695
    %v454 = vpow.pop %v453
    %v455 = vadd.f32 %v452, 1.0
    %v456 = vadd.f32 %v454, 1.0
    %v457 = vrcp.pop %v455
    %v458 = vrcp.pop %v456
    %459 = vst [vmem:[#allocation10] sm:$0xff] %v457
    %460 = vst [vmem:[#allocation10 + $0x8] sm:$0xff] %v458
    // Predicated region
    $region46: #{tpu_custom_call.1} parent=1 // pred_check
      _
    $region47: #{tpu_custom_call.1} parent=1 // pred_check_branch
      %462 = sbr.rel (0) target = $region49
    $region48: #{tpu_custom_call.1} parent=1 // pred_region
      %s464 = ssub.s32 256, 256
      %465 = vsyncadd [#allocation4], %s464
      %s466 = sshll.u32 [#allocation10], 4
      %s467 = int_to_ptr.vmem [resolvable:$true] %s466
      %472 = dma.vmem_to_hbm [thread:$0]  %s467, 256, %s7, [#allocation4], 128, 128, 8
    $region49: #{tpu_custom_call.1} parent=1 // pred_fallthru
      _
    // Predicated region
    $region50: #{tpu_custom_call.1} parent=1 // pred_check
      _
    $region51: #{tpu_custom_call.1} parent=1 // pred_check_branch
      %474 = sbr.rel (0) target = $region53
    $region52: #{tpu_custom_call.1} parent=1 // pred_region
      %475 = dma.done [#allocation4], 256
    $region53: #{tpu_custom_call.1} parent=1 // pred_fallthru
      _
    %476 = vsyncpa [#allocation3], 1
    %477 = vsyncpa [#allocation6], 1
    %478 = vsyncpa [#allocation9], 1
    %479 = vsyncpa [#allocation4], 1

</llo_original>
